<compile_context>
chip_gen: v7x
topology: tpu7x:2x2x1
jax: 0.10.0
libtpu: 0.0.40
codegen_flags: <defaults>
</compile_context>

<pallas_src>
import functools

import jax
import jax.numpy as jnp
from jax import lax
from jax.experimental import pallas as pl
from jax.experimental.pallas import tpu as pltpu

_BN_EPS = 1e-5


def det_meta_kernel(w_ref, p_ref, loss_ref, *, n, hw, k_taps):
    """Fused conv3x3(+bias) + BN(train) + ReLU + global-avg-pool + Frobenius norm.

    w_ref   : (Cout_pad, Kpad) VMEM  packed conv weights; columns [k_taps, k_taps+1, k_taps+2]
                                     hold (conv bias, BN gamma, BN beta); padded rows/cols are 0.
    p_ref   : (Kpad, N*H*W)   VMEM   im2col patch slab; rows >= k_taps are all zero.
    loss_ref: (1, 1)          SMEM   scalar output (Frobenius norm).
    """
    cout_pad = w_ref.shape[0]
    cnt = n * hw                      # number of real columns (no column padding in this layout)

    # ---- Conv2d as a single MXU matmul: (8, 32) @ (32, N*H*W) -> (8, N*H*W) ----
    # The stashed bias/gamma/beta columns multiply all-zero patch rows -> no effect on the product.
    acc = jnp.dot(w_ref[...], p_ref[...], preferred_element_type=jnp.float32)

    bias = w_ref[:, k_taps:k_taps + 1]          # (Cout_pad, 1)
    gamma = w_ref[:, k_taps + 1:k_taps + 2]
    beta = w_ref[:, k_taps + 2:k_taps + 3]
    acc = acc + bias                             # conv bias (padded channels: bias = 0)

    # ---- BatchNorm2d training statistics (two-pass: mean, then centered sum of squares) ----
    inv_cnt = 1.0 / float(cnt)
    mean = jnp.sum(acc, axis=1, keepdims=True) * inv_cnt          # (Cout_pad, 1)
    diff = acc - mean
    var = jnp.sum(diff * diff, axis=1, keepdims=True) * inv_cnt   # biased variance

    scale = gamma * lax.rsqrt(var + _BN_EPS)                      # padded channels -> scale = 0
    y = jnp.maximum(diff * scale + beta, 0.0)                     # BN affine + ReLU, one VPU pass

    # ---- AdaptiveAvgPool2d((1,1)) per sample + Frobenius norm over (N, Cout) ----
    # Per-sample columns are selected with a lane mask (robust to HW not being a lane multiple;
    # avoids cross-lane relayout copies from strided slices).
    col = lax.broadcasted_iota(jnp.int32, y.shape, 1)
    inv_hw = 1.0 / float(hw)
    ssq = jnp.zeros((cout_pad, 1), jnp.float32)
    for i in range(n):                                            # tiny static loop over batch
        m = (col >= i * hw) & (col < (i + 1) * hw)
        pooled = jnp.sum(jnp.where(m, y, 0.0), axis=1, keepdims=True) * inv_hw   # (Cout_pad, 1)
        ssq = ssq + pooled * pooled
    total = jnp.sum(ssq, axis=0, keepdims=True)                   # (1, 1)
    loss_ref[0, 0] = jnp.sqrt(total)[0, 0]                        # scalar store to SMEM

    # TODO(synk): self.scale_weight.fill_(1.0) is a stateful buffer mutation with no tensor compute;
    #             carry it as Python/JAX-side state outside the kernel. The eval-mode inference()
    #             path (Instances/Boxes construction) is metadata-only and not a kernel.


@jax.jit
def det_meta_arch_forward(x_nchw, conv_w, conv_b, bn_gamma, bn_beta):
    """Wrapper: NCHW input (PyTorch convention) -> scalar training loss."""
    N, Cin, H, W = x_nchw.shape
    Cout, _, KH, KW = conv_w.shape
    NHW = N * H * W
    HW = H * W

    K_taps = Cin * KH * KW                         # 27 conv taps
    Kpad = ((K_taps + 3 + 7) // 8) * 8             # taps + (bias,gamma,beta) columns -> 32
    Cout_pad = max(8, ((Cout + 7) // 8) * 8)       # sublane-aligned output channels -> 8

    # ---- im2col in ONE op (tap ordering: input channel slowest, kh, kw fastest) ----
    patches = lax.conv_general_dilated_patches(
        x_nchw.astype(jnp.float32),
        filter_shape=(KH, KW),
        window_strides=(1, 1),
        padding=((1, 1), (1, 1)),
        dimension_numbers=("NCHW", "OIHW", "NCHW"),
    )                                              # (N, K_taps, H, W)
    patches = jnp.transpose(patches, (1, 0, 2, 3)).reshape(K_taps, NHW)
    patches = jnp.pad(patches, ((0, Kpad - K_taps), (0, 0)))       # zero rows guard stashed params

    # ---- packed weights: (Cout, K_taps) taps || (bias, gamma, beta) in the dead padding columns ----
    w_taps = conv_w.reshape(Cout, K_taps).astype(jnp.float32)      # same (ci, kh, kw) ordering
    params = jnp.stack([conv_b, bn_gamma, bn_beta], axis=1).astype(jnp.float32)   # (Cout, 3)
    w2 = jnp.concatenate([w_taps, params], axis=1)                 # (Cout, K_taps + 3)
    w2 = jnp.pad(w2, ((0, Cout_pad - Cout), (0, Kpad - (K_taps + 3))))             # (Cout_pad, Kpad)

    loss = pl.pallas_call(
        functools.partial(det_meta_kernel, n=N, hw=HW, k_taps=K_taps),
        out_shape=jax.ShapeDtypeStruct((1, 1), jnp.float32),
        grid=(1,),
        in_specs=[
            pl.BlockSpec((Cout_pad, Kpad), lambda i: (0, 0)),
            pl.BlockSpec((Kpad, NHW), lambda i: (0, 0)),
        ],
        out_specs=pl.BlockSpec(memory_space=pltpu.SMEM),
        compiler_params=pltpu.CompilerParams(
            dimension_semantics=("arbitrary",),
            # Let XLA fuse the patch-slab layout ops into the kernel's input pipeline
            # (avoids a separate HBM materialization of the im2col slab where possible).
            allow_input_fusion=[False, True],
        ),
    )(w2, patches)
    return loss[0, 0]


def _reference_loss(x_nchw, conv_w, conv_b, bn_gamma, bn_beta):
    """Pure-JAX reference replicating the PyTorch training forward."""
    conv = lax.conv_general_dilated(
        x_nchw, conv_w, window_strides=(1, 1), padding="SAME",
        dimension_numbers=("NCHW", "OIHW", "NCHW"))
    conv = conv + conv_b.reshape(1, -1, 1, 1)
    mean = conv.mean(axis=(0, 2, 3), keepdims=True)
    var = ((conv - mean) ** 2).mean(axis=(0, 2, 3), keepdims=True)   # biased (BN normalization)
    y = (conv - mean) / jnp.sqrt(var + _BN_EPS)
    y = y * bn_gamma.reshape(1, -1, 1, 1) + bn_beta.reshape(1, -1, 1, 1)
    y = jnp.maximum(y, 0.0)
    pooled = y.mean(axis=(2, 3))
    return jnp.sqrt(jnp.sum(pooled * pooled))


if __name__ == "__main__":
    N, Cin, H, W, Cout = 2, 3, 16, 16, 4

    key = jax.random.PRNGKey(0)
    kx, kw, kb = jax.random.split(key, 3)

    # Synthetic batched images (ImageList.from_tensors with equal sizes -> (N, 3, H, W)).
    x_nchw = jax.random.normal(kx, (N, Cin, H, W), dtype=jnp.float32)

    # Deterministic parameter init (PyTorch-Conv2d-style uniform bounds; BN: gamma=1, beta=0).
    fan_in = Cin * 3 * 3
    bound = 1.0 / (fan_in ** 0.5)
    conv_w = jax.random.uniform(kw, (Cout, Cin, 3, 3), jnp.float32, -bound, bound)
    conv_b = jax.random.uniform(kb, (Cout,), jnp.float32, -bound, bound)
    bn_gamma = jnp.ones((Cout,), jnp.float32)
    bn_beta = jnp.zeros((Cout,), jnp.float32)

    loss = det_meta_arch_forward(x_nchw, conv_w, conv_b, bn_gamma, bn_beta)
    loss = jax.block_until_ready(loss)

    ref = _reference_loss(x_nchw, conv_w, conv_b, bn_gamma, bn_beta)
    assert jnp.allclose(loss, ref, rtol=1e-4, atol=1e-5), (loss, ref)

    print("KERNEL_OK")
</pallas_src>

<mosaic_0001>
module attributes {stable_mosaic.version = 11 : i64} {
  func.func @det_meta_kernel(%arg0: i32, %arg1: memref<8x32xf32, #tpu.memory_space<vmem>>, %arg2: memref<32x512xf32, #tpu.memory_space<vmem>>, %arg3: memref<1x1xf32, #tpu.memory_space<smem>>) attributes {dimension_semantics = [#tpu.dimension_semantics<arbitrary>], iteration_bounds = array<i64: 1>, scalar_prefetch = 0 : i64, scratch_operands = 0 : i64, tpu.core_type = #tpu.core_type<tc>, window_params = [{pipeline_mode = #tpu.pipeline_mode<synchronous>, transform_indices = @transform_0, window_bounds = array<i64: 8, 32>}, {pipeline_mode = #tpu.pipeline_mode<synchronous>, transform_indices = @transform_1, window_bounds = array<i64: 32, 512>}, {transform_indices = @transform_2, window_bounds = array<i64: 1, 1>}]} {
    %c0 = arith.constant 0 : index
    %c0_0 = arith.constant 0 : index
    %0 = vector.load %arg1[%c0, %c0_0] : memref<8x32xf32, #tpu.memory_space<vmem>>, vector<8x32xf32>
    %c0_1 = arith.constant 0 : index
    %c0_2 = arith.constant 0 : index
    %1 = vector.load %arg2[%c0_1, %c0_2] : memref<32x512xf32, #tpu.memory_space<vmem>>, vector<32x512xf32>
    %cst = arith.constant dense<0.000000e+00> : vector<8x512xf32>
    %2 = tpu.matmul %0, %1, %cst {dimension_numbers = #tpu.dot_dimension_numbers<[1], [0], [0], [1], [0, 0, 1, 1], [], []>} : vector<8x32xf32>, vector<32x512xf32>, vector<8x512xf32> -> vector<8x512xf32>
    %c0_3 = arith.constant 0 : index
    %c27 = arith.constant 27 : index
    %3 = vector.load %arg1[%c0_3, %c27] : memref<8x32xf32, #tpu.memory_space<vmem>>, vector<8x1xf32>
    %c0_4 = arith.constant 0 : index
    %c28 = arith.constant 28 : index
    %4 = vector.load %arg1[%c0_4, %c28] : memref<8x32xf32, #tpu.memory_space<vmem>>, vector<8x1xf32>
    %c0_5 = arith.constant 0 : index
    %c29 = arith.constant 29 : index
    %5 = vector.load %arg1[%c0_5, %c29] : memref<8x32xf32, #tpu.memory_space<vmem>>, vector<8x1xf32>
    %6 = vector.broadcast %3 : vector<8x1xf32> to vector<8x512xf32>
    %7 = arith.addf %2, %6 : vector<8x512xf32>
    %cst_6 = arith.constant dense<0.000000e+00> : vector<8xf32>
    %8 = vector.multi_reduction <add>, %7, %cst_6 [1] : vector<8x512xf32> to vector<8xf32>
    %9 = vector.shape_cast %8 : vector<8xf32> to vector<8x1xf32>
    %cst_7 = arith.constant 0.001953125 : f32
    %10 = vector.broadcast %cst_7 : f32 to vector<8x1xf32>
    %11 = arith.mulf %9, %10 : vector<8x1xf32>
    %12 = vector.broadcast %11 : vector<8x1xf32> to vector<8x512xf32>
    %13 = arith.subf %7, %12 : vector<8x512xf32>
    %14 = arith.mulf %13, %13 : vector<8x512xf32>
    %cst_8 = arith.constant dense<0.000000e+00> : vector<8xf32>
    %15 = vector.multi_reduction <add>, %14, %cst_8 [1] : vector<8x512xf32> to vector<8xf32>
    %16 = vector.shape_cast %15 : vector<8xf32> to vector<8x1xf32>
    %cst_9 = arith.constant 0.001953125 : f32
    %17 = vector.broadcast %cst_9 : f32 to vector<8x1xf32>
    %18 = arith.mulf %16, %17 : vector<8x1xf32>
    %cst_10 = arith.constant 9.99999974E-6 : f32
    %19 = vector.broadcast %cst_10 : f32 to vector<8x1xf32>
    %20 = arith.addf %18, %19 : vector<8x1xf32>
    %21 = math.rsqrt %20 : vector<8x1xf32>
    %22 = arith.mulf %4, %21 : vector<8x1xf32>
    %23 = vector.broadcast %22 : vector<8x1xf32> to vector<8x512xf32>
    %24 = arith.mulf %13, %23 : vector<8x512xf32>
    %25 = vector.broadcast %5 : vector<8x1xf32> to vector<8x512xf32>
    %26 = arith.addf %24, %25 : vector<8x512xf32>
    %cst_11 = arith.constant 0.000000e+00 : f32
    %27 = vector.broadcast %cst_11 : f32 to vector<8x512xf32>
    %28 = arith.maximumf %26, %27 : vector<8x512xf32>
    %29 = tpu.iota {dimensions = array<i32: 1>} : vector<8x512xi32>
    %cst_12 = arith.constant 0.000000e+00 : f32
    %30 = vector.broadcast %cst_12 : f32 to vector<8x1xf32>
    %c0_i32 = arith.constant 0 : i32
    %31 = vector.broadcast %c0_i32 : i32 to vector<8x512xi32>
    %32 = arith.cmpi sge, %29, %31 : vector<8x512xi32>
    %c256_i32 = arith.constant 256 : i32
    %33 = vector.broadcast %c256_i32 : i32 to vector<8x512xi32>
    %34 = arith.cmpi slt, %29, %33 : vector<8x512xi32>
    %35 = arith.andi %32, %34 : vector<8x512xi1>
    %cst_13 = arith.constant 0.000000e+00 : f32
    %36 = vector.broadcast %cst_13 : f32 to vector<8x512xf32>
    %37 = arith.select %35, %28, %36 : vector<8x512xi1>, vector<8x512xf32>
    %cst_14 = arith.constant dense<0.000000e+00> : vector<8xf32>
    %38 = vector.multi_reduction <add>, %37, %cst_14 [1] : vector<8x512xf32> to vector<8xf32>
    %39 = vector.shape_cast %38 : vector<8xf32> to vector<8x1xf32>
    %cst_15 = arith.constant 3.906250e-03 : f32
    %40 = vector.broadcast %cst_15 : f32 to vector<8x1xf32>
    %41 = arith.mulf %39, %40 : vector<8x1xf32>
    %42 = arith.mulf %41, %41 : vector<8x1xf32>
    %43 = arith.addf %30, %42 : vector<8x1xf32>
    %c256_i32_16 = arith.constant 256 : i32
    %44 = vector.broadcast %c256_i32_16 : i32 to vector<8x512xi32>
    %45 = arith.cmpi sge, %29, %44 : vector<8x512xi32>
    %c512_i32 = arith.constant 512 : i32
    %46 = vector.broadcast %c512_i32 : i32 to vector<8x512xi32>
    %47 = arith.cmpi slt, %29, %46 : vector<8x512xi32>
    %48 = arith.andi %45, %47 : vector<8x512xi1>
    %cst_17 = arith.constant 0.000000e+00 : f32
    %49 = vector.broadcast %cst_17 : f32 to vector<8x512xf32>
    %50 = arith.select %48, %28, %49 : vector<8x512xi1>, vector<8x512xf32>
    %cst_18 = arith.constant dense<0.000000e+00> : vector<8xf32>
    %51 = vector.multi_reduction <add>, %50, %cst_18 [1] : vector<8x512xf32> to vector<8xf32>
    %52 = vector.shape_cast %51 : vector<8xf32> to vector<8x1xf32>
    %cst_19 = arith.constant 3.906250e-03 : f32
    %53 = vector.broadcast %cst_19 : f32 to vector<8x1xf32>
    %54 = arith.mulf %52, %53 : vector<8x1xf32>
    %55 = arith.mulf %54, %54 : vector<8x1xf32>
    %56 = arith.addf %43, %55 : vector<8x1xf32>
    %cst_20 = arith.constant dense<0.000000e+00> : vector<1xf32>
    %57 = vector.multi_reduction <add>, %56, %cst_20 [0] : vector<8x1xf32> to vector<1xf32>
    %58 = vector.shape_cast %57 : vector<1xf32> to vector<1x1xf32>
    %59 = math.sqrt %58 : vector<1x1xf32>
    %60 = vector.extract %59[0, 0] : f32 from vector<1x1xf32>
    %c0_21 = arith.constant 0 : index
    %c0_22 = arith.constant 0 : index
    %61 = memref.load %arg3[%c0_21, %c0_22] : memref<1x1xf32, #tpu.memory_space<smem>>
    memref.store %60, %arg3[%c0_21, %c0_22] : memref<1x1xf32, #tpu.memory_space<smem>>
    return
  }
  func.func @transform_0(%arg0: i32) -> (i32, i32) {
    %c0_i32 = arith.constant 0 : i32
    %c0_i32_0 = arith.constant 0 : i32
    %c0_i32_1 = arith.constant 0 : i32
    return %c0_i32, %c0_i32_0 : i32, i32
  }
  func.func @transform_1(%arg0: i32) -> (i32, i32) {
    %c0_i32 = arith.constant 0 : i32
    %c0_i32_0 = arith.constant 0 : i32
    %c0_i32_1 = arith.constant 0 : i32
    return %c0_i32, %c0_i32_0 : i32, i32
  }
  func.func @transform_2(%arg0: i32) -> (i32, i32) {
    %c0_i32 = arith.constant 0 : i32
    %c0_i32_0 = arith.constant 0 : i32
    %c0_i32_1 = arith.constant 0 : i32
    return %c0_i32, %c0_i32_0 : i32, i32
  }
}

</mosaic_0001>

<llo_original>
// kernel: det_meta_arch_forward.2
$region0: #{det_meta_arch_forward.2}
  #allocation0 [shape = 'u32[]', space=smem, size = 0x4, offset = 0x4, fixed_abs, tag = 'smem constant byte address 0x4 - core index']
  #allocation1 [shape = 'u32[144,128]{1,0:T(1,128)}', space=vmem, size = 0x12000, scoped, tag = 'internal scratch']
  #allocation2 [shape = 'u32[2048]{0}', space=vmem, size = 0x2000, scoped, tag = 'scoped memory for det_meta_arch_forward.2']
  #allocation3 [shape = 'u32[2048]{0}', space=vmem, size = 0x2000, scoped, tag = 'scoped memory for det_meta_arch_forward.2']
  #allocation4 [shape = 'u32[2048]{0}', space=vmem, size = 0x2000, scoped, tag = 'scoped memory for det_meta_arch_forward.2']
  #allocation5 [shape = 'u32[2048]{0}', space=vmem, size = 0x2000, scoped, tag = 'scoped memory for det_meta_arch_forward.2']
  #allocation6 [shape = 'u32[2048]{0}', space=vmem, size = 0x2000, scoped, tag = 'scoped memory for det_meta_arch_forward.2']
  %s0 = inlined_call_operand.vmem [shape: f32[8,32], index: 0, kind: input, shape index: {}]
  %s1 = inlined_call_operand.vmem [shape: f32[27,512], index: 1, kind: input, shape index: {}]
  %s2 = inlined_call_operand.<no memory space> [shape: f32[], index: 2, kind: input, shape index: {}]
  %s3 = inlined_call_operand.hbm [shape: f32[1,1], index: 3, kind: output, shape index: {}]
  %s4 = sld [smem:[#allocation0]]
  $region18: #{det_meta_arch_forward.2} parent=0
    _
  %s6 = ssub.s32 1, %s4
  %s7 = scalar_select 0, %s6, %s4
  %v8 = vstv %s2
  $region1: #{det_meta_arch_forward.2} parent=0
    #allocation7 [shape = 'u8[512]{0}', space=smem, size = 0x200, scoped, tag = 'output window, operand 0, single buffered']
    #allocation8 [shape = 's32[1]{0}', space=sflag, size = 0x4, scoped, tag = 'scoped memory for det_meta_arch_forward.2']
    #allocation9 [shape = 'u8[65536]{0}', space=vmem, size = 0x10000, dematerialized = true, scoped, tag = 'FusionAdapter Buffer %fusion.1 = f32[32,512]{1,0:T(8,128)} fusion(%param_1.1, %param_2), kind=kLoop, calls=%fused_computation.1.clone, metadata={op_name="jit(det_meta_arch_forward)/jit(_pad)/pad" stack_frame_id=9}']
    %9 = vsyncpa [#allocation8], 0
    // Predicated region
    $region2: #{det_meta_arch_forward.2} parent=1 // pred_check
      _
    $region3: #{det_meta_arch_forward.2} parent=1 // pred_check_branch
      %11 = sbr.rel (0) target = $region5
    $region4: #{det_meta_arch_forward.2} parent=1 // pred_region
      _
    $region5: #{det_meta_arch_forward.2} parent=1 // pred_fallthru
      _
    // Predicated region
    $region6: #{det_meta_arch_forward.2} parent=1 // pred_check
      _
    $region7: #{det_meta_arch_forward.2} parent=1 // pred_check_branch
      %13 = sbr.rel (0) target = $region9
    $region8: #{det_meta_arch_forward.2} parent=1 // pred_region
      _
    $region9: #{det_meta_arch_forward.2} parent=1 // pred_fallthru
      _
    %v14 = vld [vmem:[%s1] sm:$0xff]
    %v15 = vlaneseq
    %v16 = vshrl.u32 %v15, 7
    %vm18 = vcmp.lt.s32.totalorder %v16, 27
    %v19 = vsel %vm18, %v14, %v8
    %21 = vst [vmem:[#allocation9] sm:$0xff] %v19
    %s22 = scalar_lea.vmem %s1, 8
    %v23 = vld [vmem:[%s22] sm:$0xff]
    %v24 = vlaneseq
    %v25 = vshrl.u32 %v24, 7
    %vm27 = vcmp.lt.s32.totalorder %v25, 27
    %v28 = vsel %vm27, %v23, %v8
    %s29 = scalar_lea.vmem [#allocation9], 8
    %31 = vst [vmem:[%s29] sm:$0xff] %v28
    %s32 = scalar_lea.vmem %s1, 16
    %v33 = vld [vmem:[%s32] sm:$0xff]
    %v34 = vlaneseq
    %v35 = vshrl.u32 %v34, 7
    %vm37 = vcmp.lt.s32.totalorder %v35, 27
    %v38 = vsel %vm37, %v33, %v8
    %s39 = scalar_lea.vmem [#allocation9], 16
    %41 = vst [vmem:[%s39] sm:$0xff] %v38
    %s42 = scalar_lea.vmem %s1, 24
    %v43 = vld [vmem:[%s42] sm:$0xff]
    %v44 = vlaneseq
    %v45 = vshrl.u32 %v44, 7
    %vm47 = vcmp.lt.s32.totalorder %v45, 27
    %v48 = vsel %vm47, %v43, %v8
    %s49 = scalar_lea.vmem [#allocation9], 24
    %51 = vst [vmem:[%s49] sm:$0xff] %v48
    %s52 = scalar_lea.vmem %s1, 32
    %v53 = vld [vmem:[%s52] sm:$0xff]
    %v54 = vlaneseq
    %v55 = vshrl.u32 %v54, 7
    %v56 = vadd.s32 %v55, 8
    %vm57 = vcmp.lt.s32.totalorder %v56, 27
    %v58 = vsel %vm57, %v53, %v8
    %s59 = scalar_lea.vmem [#allocation9], 32
    %61 = vst [vmem:[%s59] sm:$0xff] %v58
    %s62 = scalar_lea.vmem %s1, 40
    %v63 = vld [vmem:[%s62] sm:$0xff]
    %v64 = vlaneseq
    %v65 = vshrl.u32 %v64, 7
    %v66 = vadd.s32 %v65, 8
    %vm67 = vcmp.lt.s32.totalorder %v66, 27
    %v68 = vsel %vm67, %v63, %v8
    %s69 = scalar_lea.vmem [#allocation9], 40
    %71 = vst [vmem:[%s69] sm:$0xff] %v68
    %s72 = scalar_lea.vmem %s1, 48
    %v73 = vld [vmem:[%s72] sm:$0xff]
    %v74 = vlaneseq
    %v75 = vshrl.u32 %v74, 7
    %v76 = vadd.s32 %v75, 8
    %vm77 = vcmp.lt.s32.totalorder %v76, 27
    %v78 = vsel %vm77, %v73, %v8
    %s79 = scalar_lea.vmem [#allocation9], 48
    %81 = vst [vmem:[%s79] sm:$0xff] %v78
    %s82 = scalar_lea.vmem %s1, 56
    %v83 = vld [vmem:[%s82] sm:$0xff]
    %v84 = vlaneseq
    %v85 = vshrl.u32 %v84, 7
    %v86 = vadd.s32 %v85, 8
    %vm87 = vcmp.lt.s32.totalorder %v86, 27
    %v88 = vsel %vm87, %v83, %v8
    %s89 = scalar_lea.vmem [#allocation9], 56
    %91 = vst [vmem:[%s89] sm:$0xff] %v88
    %s92 = scalar_lea.vmem %s1, 64
    %v93 = vld [vmem:[%s92] sm:$0xff]
    %v94 = vlaneseq
    %v95 = vshrl.u32 %v94, 7
    %v96 = vadd.s32 %v95, 16
    %vm97 = vcmp.lt.s32.totalorder %v96, 27
    %v98 = vsel %vm97, %v93, %v8
    %s99 = scalar_lea.vmem [#allocation9], 64
    %101 = vst [vmem:[%s99] sm:$0xff] %v98
    %s102 = scalar_lea.vmem %s1, 72
    %v103 = vld [vmem:[%s102] sm:$0xff]
    %v104 = vlaneseq
    %v105 = vshrl.u32 %v104, 7
    %v106 = vadd.s32 %v105, 16
    %vm107 = vcmp.lt.s32.totalorder %v106, 27
    %v108 = vsel %vm107, %v103, %v8
    %s109 = scalar_lea.vmem [#allocation9], 72
    %111 = vst [vmem:[%s109] sm:$0xff] %v108
    %s112 = scalar_lea.vmem %s1, 80
    %v113 = vld [vmem:[%s112] sm:$0xff]
    %v114 = vlaneseq
    %v115 = vshrl.u32 %v114, 7
    %v116 = vadd.s32 %v115, 16
    %vm117 = vcmp.lt.s32.totalorder %v116, 27
    %v118 = vsel %vm117, %v113, %v8
    %s119 = scalar_lea.vmem [#allocation9], 80
    %121 = vst [vmem:[%s119] sm:$0xff] %v118
    %s122 = scalar_lea.vmem %s1, 88
    %v123 = vld [vmem:[%s122] sm:$0xff]
    %v124 = vlaneseq
    %v125 = vshrl.u32 %v124, 7
    %v126 = vadd.s32 %v125, 16
    %vm127 = vcmp.lt.s32.totalorder %v126, 27
    %v128 = vsel %vm127, %v123, %v8
    %s129 = scalar_lea.vmem [#allocation9], 88
    %131 = vst [vmem:[%s129] sm:$0xff] %v128
    %s132 = scalar_lea.vmem %s1, 96
    %v133 = vld [vmem:[%s132] sm:$0xff]
    %v134 = vlaneseq
    %v135 = vshrl.u32 %v134, 7
    %v136 = vadd.s32 %v135, 24
    %vm137 = vcmp.lt.s32.totalorder %v136, 27
    %v138 = vsel %vm137, %v133, %v8
    %s139 = scalar_lea.vmem [#allocation9], 96
    %141 = vst [vmem:[%s139] sm:$0xff] %v138
    %s142 = scalar_lea.vmem %s1, 104
    %v143 = vld [vmem:[%s142] sm:$0xff]
    %v144 = vlaneseq
    %v145 = vshrl.u32 %v144, 7
    %v146 = vadd.s32 %v145, 24
    %vm147 = vcmp.lt.s32.totalorder %v146, 27
    %v148 = vsel %vm147, %v143, %v8
    %s149 = scalar_lea.vmem [#allocation9], 104
    %151 = vst [vmem:[%s149] sm:$0xff] %v148
    %s152 = scalar_lea.vmem %s1, 112
    %v153 = vld [vmem:[%s152] sm:$0xff]
    %v154 = vlaneseq
    %v155 = vshrl.u32 %v154, 7
    %v156 = vadd.s32 %v155, 24
    %vm157 = vcmp.lt.s32.totalorder %v156, 27
    %v158 = vsel %vm157, %v153, %v8
    %s159 = scalar_lea.vmem [#allocation9], 112
    %161 = vst [vmem:[%s159] sm:$0xff] %v158
    %s162 = scalar_lea.vmem %s1, 120
    %v163 = vld [vmem:[%s162] sm:$0xff]
    %v164 = vlaneseq
    %v165 = vshrl.u32 %v164, 7
    %v166 = vadd.s32 %v165, 24
    %vm167 = vcmp.lt.s32.totalorder %v166, 27
    %v168 = vsel %vm167, %v163, %v8
    %s169 = scalar_lea.vmem [#allocation9], 120
    %171 = vst [vmem:[%s169] sm:$0xff] %v168
    %v172 = vld [vmem:[%s0] sm:$0xff]
    %v173 = vld [vmem:[#allocation9] sm:$0xff]
    %v174 = vld [vmem:[#allocation9 + $0x8] sm:$0xff]
    %v175 = vld [vmem:[#allocation9 + $0x10] sm:$0xff]
    %v176 = vld [vmem:[#allocation9 + $0x18] sm:$0xff]
    %v177 = vld [vmem:[#allocation9 + $0x20] sm:$0xff]
    %v178 = vld [vmem:[#allocation9 + $0x28] sm:$0xff]
    %v179 = vld [vmem:[#allocation9 + $0x30] sm:$0xff]
    %v180 = vld [vmem:[#allocation9 + $0x38] sm:$0xff]
    %v181 = vld [vmem:[#allocation9 + $0x40] sm:$0xff]
    %v182 = vld [vmem:[#allocation9 + $0x48] sm:$0xff]
    %v183 = vld [vmem:[#allocation9 + $0x50] sm:$0xff]
    %v184 = vld [vmem:[#allocation9 + $0x58] sm:$0xff]
    %v185 = vld [vmem:[#allocation9 + $0x60] sm:$0xff]
    %v186 = vld [vmem:[#allocation9 + $0x68] sm:$0xff]
    %v187 = vld [vmem:[#allocation9 + $0x70] sm:$0xff]
    %v188 = vld [vmem:[#allocation9 + $0x78] sm:$0xff]
    %190 = vset.pattern.permute.xlu0 27
    %191 = vperm.xlu0 %190, %v172
    %v192 = vpop.permute.xlu0 %191
    %vm194 = vcmask 261120
    %v195 = vsel %vm194, %v172, 0
    %197 = vmatprep.subr.mxu0 %v174
    %198 = vmatpush1.msra.mxu0 %v173
    %199 = vmatprep.subr.mxu0 %v178
    %200 = vmatpush1.msra.mxu0 %v177
    %201 = vmatprep.subr.mxu0 %v182
    %202 = vmatpush1.msra.mxu0 %v181
    %203 = vmatprep.subr.mxu0 %v186
    %204 = vmatpush1.msra.mxu0 %v185
    %205 = vmatprep.subr.mxu0 0.0
    %206 = vmatpush1.msra.mxu0 0.0
    %207 = vmatprep.subr.mxu0 0.0
    %208 = vmatpush1.msra.mxu0 0.0
    %209 = vmatprep.subr.mxu0 0.0
    %210 = vmatpush1.msra.mxu0 0.0
    %211 = vmatprep.subr.mxu0 0.0
    %212 = vmatpush1.msra.mxu0 0.0
    %213 = vmatprep.subr.mxu0 0.0
    %214 = vmatpush1.msra.mxu0 0.0
    %215 = vmatprep.subr.mxu0 0.0
    %216 = vmatpush1.msra.mxu0 0.0
    %217 = vmatprep.subr.mxu0 0.0
    %218 = vmatpush1.msra.mxu0 0.0
    %219 = vmatprep.subr.mxu0 0.0
    %220 = vmatpush1.msra.mxu0 0.0
    %221 = vmatprep.subr.mxu0 0.0
    %222 = vmatpush1.msra.mxu0 0.0
    %223 = vmatprep.subr.mxu0 0.0
    %224 = vmatpush1.msra.mxu0 0.0
    %225 = vmatprep.subr.mxu0 0.0
    %226 = vmatpush1.msra.mxu0 0.0
    %227 = vmatprep.subr.mxu0 0.0
    %228 = vmatpush1.msra.mxu0 0.0
    %229 = vmatprep.subr.mxu0 0.0
    %230 = vmatpush1.msra.mxu0 0.0
    %231 = vmatprep.subr.mxu0 0.0
    %232 = vmatpush1.msra.mxu0 0.0
    %233 = vmatprep.subr.mxu0 0.0
    %234 = vmatpush1.msra.mxu0 0.0
    %235 = vmatprep.subr.mxu0 0.0
    %236 = vmatpush1.msra.mxu0 0.0
    %237 = vmatprep.subr.mxu0 0.0
    %238 = vmatpush1.msra.mxu0 0.0
    %239 = vmatprep.subr.mxu0 0.0
    %240 = vmatpush1.msra.mxu0 0.0
    %241 = vmatprep.subr.mxu0 0.0
    %242 = vmatpush1.msra.mxu0 0.0
    %243 = vmatprep.subr.mxu0 0.0
    %244 = vmatpush1.msra.mxu0 0.0
    %245 = vmatprep.subr.mxu0 0.0
    %246 = vmatpush1.msra.mxu0 0.0
    %247 = vmatprep.subr.mxu0 0.0
    %248 = vmatpush1.msra.mxu0 0.0
    %249 = vmatprep.subr.mxu0 0.0
    %250 = vmatpush1.msra.mxu0 0.0
    %251 = vmatprep.subr.mxu0 0.0
    %252 = vmatpush1.msra.mxu0 0.0
    %253 = vmatprep.subr.mxu0 0.0
    %254 = vmatpush1.msra.mxu0 0.0
    %255 = vmatprep.subr.mxu0 0.0
    %256 = vmatpush1.msra.mxu0 0.0
    %257 = vmatprep.subr.mxu0 0.0
    %258 = vmatpush1.msra.mxu0 0.0
    %259 = vmatprep.subr.mxu0 0.0
    %260 = vmatpush1.msra.mxu0 0.0
    %261 = vmatprep.mubr.f32.mxu0 0.0
    %262 = vmatmul.mubr.f32.gmra.mrb[0].mxu0 %v195
    %v263 = vpop.f32.mrb[0].mxu0
    %v264 = vadd.f32 %v192, %v263
    %v265 = vpop.f32.mrb[0].mxu0
    %v266 = vadd.f32 %v192, %v265
    %267 = vdwg.mxu0
    %268 = vmatprep.subr.mxu0 %v176
    %269 = vmatpush1.msra.mxu0 %v175
    %270 = vmatprep.subr.mxu0 %v180
    %271 = vmatpush1.msra.mxu0 %v179
    %272 = vmatprep.subr.mxu0 %v184
    %273 = vmatpush1.msra.mxu0 %v183
    %274 = vmatprep.subr.mxu0 %v188
    %275 = vmatpush1.msra.mxu0 %v187
    %276 = vmatprep.subr.mxu0 0.0
    %277 = vmatpush1.msra.mxu0 0.0
    %278 = vmatprep.subr.mxu0 0.0
    %279 = vmatpush1.msra.mxu0 0.0
    %280 = vmatprep.subr.mxu0 0.0
    %281 = vmatpush1.msra.mxu0 0.0
    %282 = vmatprep.subr.mxu0 0.0
    %283 = vmatpush1.msra.mxu0 0.0
    %284 = vmatprep.subr.mxu0 0.0
    %285 = vmatpush1.msra.mxu0 0.0
    %286 = vmatprep.subr.mxu0 0.0
    %287 = vmatpush1.msra.mxu0 0.0
    %288 = vmatprep.subr.mxu0 0.0
    %289 = vmatpush1.msra.mxu0 0.0
    %290 = vmatprep.subr.mxu0 0.0
    %291 = vmatpush1.msra.mxu0 0.0
    %292 = vmatprep.subr.mxu0 0.0
    %293 = vmatpush1.msra.mxu0 0.0
    %294 = vmatprep.subr.mxu0 0.0
    %295 = vmatpush1.msra.mxu0 0.0
    %296 = vmatprep.subr.mxu0 0.0
    %297 = vmatpush1.msra.mxu0 0.0
    %298 = vmatprep.subr.mxu0 0.0
    %299 = vmatpush1.msra.mxu0 0.0
    %300 = vmatprep.subr.mxu0 0.0
    %301 = vmatpush1.msra.mxu0 0.0
    %302 = vmatprep.subr.mxu0 0.0
    %303 = vmatpush1.msra.mxu0 0.0
    %304 = vmatprep.subr.mxu0 0.0
    %305 = vmatpush1.msra.mxu0 0.0
    %306 = vmatprep.subr.mxu0 0.0
    %307 = vmatpush1.msra.mxu0 0.0
    %308 = vmatprep.subr.mxu0 0.0
    %309 = vmatpush1.msra.mxu0 0.0
    %310 = vmatprep.subr.mxu0 0.0
    %311 = vmatpush1.msra.mxu0 0.0
    %312 = vmatprep.subr.mxu0 0.0
    %313 = vmatpush1.msra.mxu0 0.0
    %314 = vmatprep.subr.mxu0 0.0
    %315 = vmatpush1.msra.mxu0 0.0
    %316 = vmatprep.subr.mxu0 0.0
    %317 = vmatpush1.msra.mxu0 0.0
    %318 = vmatprep.subr.mxu0 0.0
    %319 = vmatpush1.msra.mxu0 0.0
    %320 = vmatprep.subr.mxu0 0.0
    %321 = vmatpush1.msra.mxu0 0.0
    %322 = vmatprep.subr.mxu0 0.0
    %323 = vmatpush1.msra.mxu0 0.0
    %324 = vmatprep.subr.mxu0 0.0
    %325 = vmatpush1.msra.mxu0 0.0
    %326 = vmatprep.subr.mxu0 0.0
    %327 = vmatpush1.msra.mxu0 0.0
    %328 = vmatprep.subr.mxu0 0.0
    %329 = vmatpush1.msra.mxu0 0.0
    %330 = vmatprep.subr.mxu0 0.0
    %331 = vmatpush1.msra.mxu0 0.0
    %332 = vmatprep.mubr.f32.mxu0 0.0
    %333 = vmatmul.mubr.f32.gmra.mrb[0].mxu0 %v195
    %v334 = vpop.f32.mrb[0].mxu0
    %v335 = vadd.f32 %v192, %v334
    %v336 = vpop.f32.mrb[0].mxu0
    %v337 = vadd.f32 %v192, %v336
    %338 = vdwg.mxu0
    %v339 = vadd.f32 %v264, %v266
    %v340 = vadd.f32 %v339, %v335
    %v341 = vadd.f32 %v340, %v337
    %342 = vadd.xlane.f32.xlu0 %v341
    %v343 = vpop.xlane.xlu0 %342
    %v344 = vmul.f32 %v343, 0.001953125
    %v345 = vsub.f32 %v264, %v344
    %v346 = vsub.f32 %v266, %v344
    %v347 = vsub.f32 %v335, %v344
    %v348 = vsub.f32 %v337, %v344
    %v349 = vmul.f32 %v345, %v345
    %v350 = vmul.f32 %v346, %v346
    %v351 = vmul.f32 %v347, %v347
    %v352 = vmul.f32 %v348, %v348
    %v353 = vadd.f32 %v349, %v350
    %v354 = vadd.f32 %v353, %v351
    %v355 = vadd.f32 %v354, %v352
    %356 = vadd.xlane.f32.xlu0 %v355
    %v357 = vpop.xlane.xlu0 %356
    %v358 = vmul.f32 %v357, 0.001953125
    %v359 = vadd.f32 %v358, 1e-05
    %v360 = vrsqrt.pop %v359
    %v361 = vmul.f32 %v172, %v360
    %363 = vset.pattern.permute.xlu0 28
    %364 = vperm.xlu0 %363, %v361
    %v365 = vpop.permute.xlu0 %364
    %v367 = vmul.f32 %v345, %v365
    %v368 = vmul.f32 %v346, %v365
    %v369 = vmul.f32 %v347, %v365
    %v370 = vmul.f32 %v348, %v365
    %371 = vset.pattern.permute.xlu0 29
    %372 = vperm.xlu0 %371, %v172
    %v373 = vpop.permute.xlu0 %372
    %v375 = vadd.f32 %v367, %v373
    %v376 = vadd.f32 %v368, %v373
    %v377 = vadd.f32 %v369, %v373
    %v378 = vadd.f32 %v370, %v373
    %v379 = vmax.f32 %v375, 0.0
    %v380 = vmax.f32 %v376, 0.0
    %v381 = vmax.f32 %v377, 0.0
    %v382 = vmax.f32 %v378, 0.0
    %v383 = vlaneseq
    %v384 = vand.u32 %v383, 127
    %v385 = vadd.s32 %v384, 128
    %v386 = vadd.s32 %v384, 256
    %v387 = vadd.s32 %v384, 384
    %vm388 = vcmp.ge.s32.totalorder %v384, 0
    %vm389 = vcmp.ge.s32.totalorder %v385, 0
    %vm390 = vcmp.ge.s32.totalorder %v386, 0
    %vm391 = vcmp.ge.s32.totalorder %v387, 0
    %vm392 = vcmp.lt.s32.totalorder %v384, 256
    %vm393 = vcmp.lt.s32.totalorder %v385, 256
    %vm394 = vcmp.lt.s32.totalorder %v386, 256
    %vm395 = vcmp.lt.s32.totalorder %v387, 256
    %vm396 = vmand %vm388, %vm392
    %vm397 = vmand %vm389, %vm393
    %vm398 = vmand %vm390, %vm394
    %vm399 = vmand %vm391, %vm395
    %v400 = vsel %vm396, %v379, 0.0
    %v401 = vsel %vm397, %v380, 0.0
    %v402 = vsel %vm398, %v381, 0.0
    %v403 = vsel %vm399, %v382, 0.0
    %v404 = vadd.f32 %v400, %v401
    %v405 = vadd.f32 %v404, %v402
    %v406 = vadd.f32 %v405, %v403
    %407 = vadd.xlane.f32.xlu0 %v406
    %v408 = vpop.xlane.xlu0 %407
    %v409 = vmul.f32 %v408, 0.00390625
    %v410 = vmul.f32 %v409, %v409
    %v411 = vadd.f32 %v410, 0.0
    %vm412 = vcmp.ge.s32.totalorder %v384, 256
    %vm413 = vcmp.ge.s32.totalorder %v385, 256
    %vm414 = vcmp.ge.s32.totalorder %v386, 256
    %vm415 = vcmp.ge.s32.totalorder %v387, 256
    %vm416 = vcmp.lt.s32.totalorder %v384, 512
    %vm417 = vcmp.lt.s32.totalorder %v385, 512
    %vm418 = vcmp.lt.s32.totalorder %v386, 512
    %vm419 = vcmp.lt.s32.totalorder %v387, 512
    %vm420 = vmand %vm412, %vm416
    %vm421 = vmand %vm413, %vm417
    %vm422 = vmand %vm414, %vm418
    %vm423 = vmand %vm415, %vm419
    %v424 = vsel %vm420, %v379, 0.0
    %v425 = vsel %vm421, %v380, 0.0
    %v426 = vsel %vm422, %v381, 0.0
    %v427 = vsel %vm423, %v382, 0.0
    %v428 = vadd.f32 %v424, %v425
    %v429 = vadd.f32 %v428, %v426
    %v430 = vadd.f32 %v429, %v427
    %431 = vadd.xlane.f32.xlu0 %v430
    %v432 = vpop.xlane.xlu0 %431
    %v433 = vmul.f32 %v432, 0.00390625
    %v434 = vmul.f32 %v433, %v433
    %v435 = vadd.f32 %v411, %v434
    %v436 = vrot.slane %v435, 4
    %v437 = vadd.f32 %v435, %v436
    %v438 = vrot.slane %v437, 2
    %v439 = vadd.f32 %v437, %v438
    %v440 = vrot.slane %v439, 1
    %v441 = vadd.f32 %v439, %v440
    %v442 = vrsqrt.pop %v441
    %v443 = vmul.f32 %v441, %v442
    %vm444 = vcmp.eq.f32.partialorder %v441, inf
    %v445 = vsel %vm444, %v441, %v443
    %vm446 = vcmp.eq.f32.partialorder %v441, 0.0
    %v447 = vand.u32 %v441, 2147483648
    %v448 = vsel %vm446, %v447, %v445
    %s449 = vtos %v448
    %s450 = scalar_lea.smem [#allocation7], 0
    %451 = sst [smem:[%s450]] %s449
    // Predicated region
    $region10: #{det_meta_arch_forward.2} parent=1 // pred_check
      _
    $region11: #{det_meta_arch_forward.2} parent=1 // pred_check_branch
      %453 = sbr.rel (0) target = $region13
    $region12: #{det_meta_arch_forward.2} parent=1 // pred_region
      %s455 = ssub.s32 16, 16
      %456 = vsyncadd [#allocation8], %s455
      %459 = dma.smem_to_hbm [#allocation7], 16, %s3, [#allocation8]
    $region13: #{det_meta_arch_forward.2} parent=1 // pred_fallthru
      _
    // Predicated region
    $region14: #{det_meta_arch_forward.2} parent=1 // pred_check
      _
    $region15: #{det_meta_arch_forward.2} parent=1 // pred_check_branch
      %461 = sbr.rel (0) target = $region17
    $region16: #{det_meta_arch_forward.2} parent=1 // pred_region
      %462 = dma.done [#allocation8], 16
    $region17: #{det_meta_arch_forward.2} parent=1 // pred_fallthru
      _
    %463 = sfence
    %464 = vsyncpa [#allocation8], 1

</llo_original>
